<compile_context>
chip_gen: v5e
topology: v5e:2x2
jax: 0.10.0
libtpu: 0.0.40
codegen_flags: <defaults>
</compile_context>

<pallas_src>
import functools

import numpy as np

import jax
import jax.numpy as jnp
from jax.experimental import pallas as pl
from jax.experimental.pallas import tpu as pltpu


# Conservative scoped-VMEM budget that is safe on v5e/v6e (128 MiB physical)
# and v7x (64 MiB physical).
_VMEM_BUDGET = 48 * 1024 * 1024


def _round_up(x, m):
    return (x + m - 1) // m * m


def _padded_block_bytes(block_shape, itemsize):
    """VMEM footprint of one buffer: last dim pads to 128 lanes, 2nd-last to 8 sublanes."""
    s = list(block_shape)
    s[-1] = _round_up(s[-1], 128)
    if len(s) >= 2:
        s[-2] = _round_up(s[-2], 8)
    n = 1
    for d in s:
        n *= d
    return n * itemsize


# --------------------------------------------------------------------------
# Kernels
# --------------------------------------------------------------------------
def _transe_fused_kernel(h_idx_ref, r_idx_ref, t_idx_ref, ent_ref, rel_ref, out_ref):
    """Both tables resident in VMEM; gathers done in-kernel via one-hot matmuls."""
    TB = h_idx_ref.shape[0]
    E = ent_ref.shape[0]
    R = rel_ref.shape[0]

    ent = ent_ref[...].astype(jnp.float32)            # (E, D) resident
    rel = rel_ref[...].astype(jnp.float32)            # (R, D) resident

    ent_iota = jax.lax.broadcasted_iota(jnp.int32, (TB, E), 1)
    rel_iota = jax.lax.broadcasted_iota(jnp.int32, (TB, R), 1)

    # (onehot(h) - onehot(t)) @ E  computes E[h] - E[t] in a single MXU pass.
    ht_onehot = (jnp.where(h_idx_ref[...] == ent_iota, 1.0, 0.0)
                 - jnp.where(t_idx_ref[...] == ent_iota, 1.0, 0.0))     # (TB, E)
    r_onehot = jnp.where(r_idx_ref[...] == rel_iota, 1.0, 0.0)          # (TB, R)

    diff = (jnp.dot(ht_onehot, ent, preferred_element_type=jnp.float32)
            + jnp.dot(r_onehot, rel, preferred_element_type=jnp.float32))   # (TB, D)

    # XLU reduce: MXU is busy with the gather matmuls above, VPU with the
    # one-hot build, so the cross-lane sum is not the critical unit here.
    out_ref[...] = jnp.sum(jnp.abs(diff), axis=-1, keepdims=True)       # (TB, 1)


def _transe_relfused_kernel(h_ref, t_ref, r_idx_ref, rel_ref, out_ref):
    """Entity gathers hoisted (streamed (TB,D) tiles); relation gather fused."""
    TB = r_idx_ref.shape[0]
    R = rel_ref.shape[0]

    rel = rel_ref[...].astype(jnp.float32)             # (R, D) resident
    rel_iota = jax.lax.broadcasted_iota(jnp.int32, (TB, R), 1)
    r_onehot = jnp.where(r_idx_ref[...] == rel_iota, 1.0, 0.0)          # (TB, R)
    r_tile = jnp.dot(r_onehot, rel, preferred_element_type=jnp.float32)  # (TB, D)

    diff = h_ref[...].astype(jnp.float32) - t_ref[...].astype(jnp.float32) + r_tile
    out_ref[...] = jnp.sum(jnp.abs(diff), axis=-1, keepdims=True)        # (TB, 1)


def _transe_stream_kernel(h_ref, r_ref, t_ref, out_ref):
    """Fallback: all three gathers hoisted; pure streaming add/sub/abs/L1."""
    diff = (h_ref[...].astype(jnp.float32)
            + r_ref[...].astype(jnp.float32)
            - t_ref[...].astype(jnp.float32))
    out_ref[...] = jnp.sum(jnp.abs(diff), axis=-1, keepdims=True)


# --------------------------------------------------------------------------
# Wrapper
# --------------------------------------------------------------------------
@functools.partial(
    jax.jit,
    static_argnames=("block_b", "max_fused_entities", "max_fused_relations", "stream_dtype"))
def transe_forward(entity_emb, relation_emb, head_idxs, relation_idxs, tail_idxs, *,
                   block_b=2048, max_fused_entities=1024, max_fused_relations=2048,
                   stream_dtype=None):
    """Pallas TransE scoring: ||E[h] + R[r] - E[t]||_1 per triple.

    * Tables small enough  -> fully fused kernel (tables resident in VMEM,
      index columns streamed, gathers via one-hot matmuls on the MXU).
    * Entity table too big -> XLA gathers E[h]/E[t] (optionally cast to
      `stream_dtype`, e.g. bf16, to halve streamed bytes at a precision cost);
      relation gather stays fused.
    * Both too big         -> fully streamed fallback (v2 behavior).
    """
    B = head_idxs.shape[0]
    E, D = entity_emb.shape
    R, Dr = relation_emb.shape
    assert D == Dr, "entity/relation embedding dims must match"

    emb_isz = entity_emb.dtype.itemsize
    s_dtype = entity_emb.dtype if stream_dtype is None else np.dtype(stream_dtype)
    s_isz = np.dtype(s_dtype).itemsize

    fuse_ent = E <= max_fused_entities
    fuse_rel = R <= max_fused_relations
    if not fuse_rel:           # E-small / R-huge corner: route to fully streamed path
        fuse_ent = False

    def vmem_estimate(tb):
        # Double-buffered pipeline blocks (inputs + output) ...
        io = []
        # ... plus single-buffered in-kernel temporaries (one-hots, diff tile).
        scratch = []
        if fuse_ent:
            io += [((tb, 1), 4)] * 3                     # h/r/t index columns
            io += [((E, D), emb_isz), ((R, D), emb_isz)]  # resident tables
            scratch += [((tb, E), 4)] * 3 + [((tb, R), 4)] * 2 + [((tb, D), 4)] * 2
        elif fuse_rel:
            io += [((tb, D), s_isz)] * 2                 # gathered h / t tiles
            io += [((tb, 1), 4)]                         # r index column
            io += [((R, D), emb_isz)]                    # resident relation table
            scratch += [((tb, R), 4)] * 2 + [((tb, D), 4)] * 3
        else:
            io += [((tb, D), s_isz)] * 3
            scratch += [((tb, D), 4)] * 2
        io += [((tb, 1), 4)]                             # output (lane-padded!)
        return (sum(2 * _padded_block_bytes(s, i) for s, i in io)
                + sum(_padded_block_bytes(s, i) for s, i in scratch))

    # Batch tile: multiple of 8 sublanes, shrunk until the VMEM estimate fits
    # the cross-generation budget (v5e default scoped 16 MiB, v7x physical 64 MiB).
    TB = _round_up(min(block_b, _round_up(B, 8)), 8)
    while vmem_estimate(TB) > _VMEM_BUDGET and TB > 8:
        TB = max(8, TB // 2)

    B_pad = _round_up(B, TB)
    pad = B_pad - B

    def prep_idx(idx):
        idx = idx.astype(jnp.int32)
        if pad:
            idx = jnp.pad(idx, (0, pad))                 # padded rows gather row 0;
        return idx.reshape(B_pad, 1)                     # their scores are sliced off.

    h_idx = prep_idx(head_idxs)
    r_idx = prep_idx(relation_idxs)
    t_idx = prep_idx(tail_idxs)

    vmem_limit = int(min(_VMEM_BUDGET,
                         max(32 * 1024 * 1024, vmem_estimate(TB) + 8 * 1024 * 1024)))
    cparams = pltpu.CompilerParams(
        dimension_semantics=("parallel",),   # independent triples; see v7x note in header
        vmem_limit_bytes=vmem_limit)

    grid = (B_pad // TB,)
    out_shape = jax.ShapeDtypeStruct((B_pad, 1), jnp.float32)
    out_spec = pl.BlockSpec((TB, 1), lambda i: (i, 0))
    idx_spec = pl.BlockSpec((TB, 1), lambda i: (i, 0))
    emb_spec = pl.BlockSpec((TB, D), lambda i: (i, 0))

    if fuse_ent:
        out = pl.pallas_call(
            _transe_fused_kernel,
            out_shape=out_shape,
            grid=grid,
            in_specs=[
                idx_spec, idx_spec, idx_spec,
                pl.BlockSpec((E, D), lambda i: (0, 0)),   # entity table, VMEM-resident
                pl.BlockSpec((R, D), lambda i: (0, 0)),   # relation table, VMEM-resident
            ],
            out_specs=out_spec,
            compiler_params=cparams,
        )(h_idx, r_idx, t_idx, entity_emb, relation_emb)
    elif fuse_rel:
        h_emb = jnp.take(entity_emb, h_idx[:, 0], axis=0).astype(s_dtype)
        t_emb = jnp.take(entity_emb, t_idx[:, 0], axis=0).astype(s_dtype)
        out = pl.pallas_call(
            _transe_relfused_kernel,
            out_shape=out_shape,
            grid=grid,
            in_specs=[
                emb_spec, emb_spec, idx_spec,
                pl.BlockSpec((R, D), lambda i: (0, 0)),   # relation table, VMEM-resident
            ],
            out_specs=out_spec,
            compiler_params=cparams,
        )(h_emb, t_emb, r_idx, relation_emb)
    else:
        h_emb = jnp.take(entity_emb, h_idx[:, 0], axis=0).astype(s_dtype)
        r_emb = jnp.take(relation_emb, r_idx[:, 0], axis=0).astype(s_dtype)
        t_emb = jnp.take(entity_emb, t_idx[:, 0], axis=0).astype(s_dtype)
        out = pl.pallas_call(
            _transe_stream_kernel,
            out_shape=out_shape,
            grid=grid,
            in_specs=[emb_spec, emb_spec, emb_spec],
            out_specs=out_spec,
            compiler_params=cparams,
        )(h_emb, r_emb, t_emb)

    return out[:B, 0]


if __name__ == "__main__":
    # Small, deterministic configuration consistent with TransE.__init__.
    num_entities = 16
    num_relations = 4
    embedding_dim = 128   # lane-aligned embedding dimension
    batch = 20            # not a multiple of the test tile -> exercises padding

    key = jax.random.PRNGKey(0)
    k_ent, k_rel, k_h, k_r, k_t = jax.random.split(key, 5)

    # nn.Embedding default init is N(0, 1).
    entity_embeddings = jax.random.normal(
        k_ent, (num_entities, embedding_dim), dtype=jnp.float32)
    relation_embeddings = jax.random.normal(
        k_rel, (num_relations, embedding_dim), dtype=jnp.float32)

    head_idxs = jax.random.randint(k_h, (batch,), 0, num_entities, dtype=jnp.int32)
    relation_idxs = jax.random.randint(k_r, (batch,), 0, num_relations, dtype=jnp.int32)
    tail_idxs = jax.random.randint(k_t, (batch,), 0, num_entities, dtype=jnp.int32)

    # Pure-JAX reference (same semantics as the torch forward).
    ref = jnp.sum(
        jnp.abs(entity_embeddings[head_idxs]
                + relation_embeddings[relation_idxs]
                - entity_embeddings[tail_idxs]),
        axis=1)

    # block_b=8 at this toy size exercises a multi-step grid (grid=(3,)) plus
    # batch padding; the production default is block_b=2048.
    common = (entity_embeddings, relation_embeddings,
              head_idxs, relation_idxs, tail_idxs)

    # Path A: fully fused (resident tables, in-kernel one-hot gathers).
    score_fused = jax.block_until_ready(transe_forward(*common, block_b=8))
    # Path B: entity gathers hoisted, relation gather fused.
    score_rel = jax.block_until_ready(
        transe_forward(*common, block_b=8, max_fused_entities=0))
    # Path C: fully streamed fallback.
    score_strm = jax.block_until_ready(
        transe_forward(*common, block_b=8, max_fused_entities=0,
                       max_fused_relations=0))

    for name, score in (("fused", score_fused),
                        ("rel_fused", score_rel),
                        ("streamed", score_strm)):
        assert score.shape == (batch,), (name, score.shape)
        assert jnp.allclose(score, ref, rtol=1e-5, atol=1e-4), (name, score, ref)

    print("KERNEL_OK")
</pallas_src>

<mosaic_0001>
module attributes {stable_mosaic.version = 11 : i64} {
  func.func @_transe_fused_kernel(%arg0: i32, %arg1: memref<8x1xi32, #tpu.memory_space<vmem>>, %arg2: memref<8x1xi32, #tpu.memory_space<vmem>>, %arg3: memref<8x1xi32, #tpu.memory_space<vmem>>, %arg4: memref<16x128xf32, #tpu.memory_space<vmem>>, %arg5: memref<4x128xf32, #tpu.memory_space<vmem>>, %arg6: memref<8x1xf32, #tpu.memory_space<vmem>>) attributes {dimension_semantics = [#tpu.dimension_semantics<parallel>], iteration_bounds = array<i64: 3>, scalar_prefetch = 0 : i64, scratch_operands = 0 : i64, tpu.core_type = #tpu.core_type<tc>, window_params = [{transform_indices = @transform_0, window_bounds = array<i64: 8, 1>}, {transform_indices = @transform_1, window_bounds = array<i64: 8, 1>}, {transform_indices = @transform_2, window_bounds = array<i64: 8, 1>}, {pipeline_mode = #tpu.pipeline_mode<synchronous>, transform_indices = @transform_3, window_bounds = array<i64: 16, 128>}, {pipeline_mode = #tpu.pipeline_mode<synchronous>, transform_indices = @transform_4, window_bounds = array<i64: 4, 128>}, {transform_indices = @transform_5, window_bounds = array<i64: 8, 1>}]} {
    %c0 = arith.constant 0 : index
    %c0_0 = arith.constant 0 : index
    %0 = vector.load %arg4[%c0, %c0_0] : memref<16x128xf32, #tpu.memory_space<vmem>>, vector<16x128xf32>
    %c0_1 = arith.constant 0 : index
    %c0_2 = arith.constant 0 : index
    %1 = vector.load %arg5[%c0_1, %c0_2] : memref<4x128xf32, #tpu.memory_space<vmem>>, vector<4x128xf32>
    %2 = tpu.iota {dimensions = array<i32: 1>} : vector<8x16xi32>
    %3 = tpu.iota {dimensions = array<i32: 1>} : vector<8x4xi32>
    %c0_3 = arith.constant 0 : index
    %c0_4 = arith.constant 0 : index
    %4 = vector.load %arg1[%c0_3, %c0_4] : memref<8x1xi32, #tpu.memory_space<vmem>>, vector<8x1xi32>
    %5 = vector.broadcast %4 : vector<8x1xi32> to vector<8x16xi32>
    %6 = arith.cmpi eq, %5, %2 : vector<8x16xi32>
    %cst = arith.constant 1.000000e+00 : f32
    %cst_5 = arith.constant 0.000000e+00 : f32
    %7 = vector.broadcast %cst : f32 to vector<8x16xf32>
    %8 = vector.broadcast %cst_5 : f32 to vector<8x16xf32>
    %9 = arith.select %6, %7, %8 : vector<8x16xi1>, vector<8x16xf32>
    %c0_6 = arith.constant 0 : index
    %c0_7 = arith.constant 0 : index
    %10 = vector.load %arg3[%c0_6, %c0_7] : memref<8x1xi32, #tpu.memory_space<vmem>>, vector<8x1xi32>
    %11 = vector.broadcast %10 : vector<8x1xi32> to vector<8x16xi32>
    %12 = arith.cmpi eq, %11, %2 : vector<8x16xi32>
    %cst_8 = arith.constant 1.000000e+00 : f32
    %cst_9 = arith.constant 0.000000e+00 : f32
    %13 = vector.broadcast %cst_8 : f32 to vector<8x16xf32>
    %14 = vector.broadcast %cst_9 : f32 to vector<8x16xf32>
    %15 = arith.select %12, %13, %14 : vector<8x16xi1>, vector<8x16xf32>
    %16 = arith.subf %9, %15 : vector<8x16xf32>
    %c0_10 = arith.constant 0 : index
    %c0_11 = arith.constant 0 : index
    %17 = vector.load %arg2[%c0_10, %c0_11] : memref<8x1xi32, #tpu.memory_space<vmem>>, vector<8x1xi32>
    %18 = vector.broadcast %17 : vector<8x1xi32> to vector<8x4xi32>
    %19 = arith.cmpi eq, %18, %3 : vector<8x4xi32>
    %cst_12 = arith.constant 1.000000e+00 : f32
    %cst_13 = arith.constant 0.000000e+00 : f32
    %20 = vector.broadcast %cst_12 : f32 to vector<8x4xf32>
    %21 = vector.broadcast %cst_13 : f32 to vector<8x4xf32>
    %22 = arith.select %19, %20, %21 : vector<8x4xi1>, vector<8x4xf32>
    %cst_14 = arith.constant dense<0.000000e+00> : vector<8x128xf32>
    %23 = tpu.matmul %16, %0, %cst_14 {dimension_numbers = #tpu.dot_dimension_numbers<[1], [0], [0], [1], [0, 0, 1, 1], [], []>} : vector<8x16xf32>, vector<16x128xf32>, vector<8x128xf32> -> vector<8x128xf32>
    %cst_15 = arith.constant dense<0.000000e+00> : vector<8x128xf32>
    %24 = tpu.matmul %22, %1, %cst_15 {dimension_numbers = #tpu.dot_dimension_numbers<[1], [0], [0], [1], [0, 0, 1, 1], [], []>} : vector<8x4xf32>, vector<4x128xf32>, vector<8x128xf32> -> vector<8x128xf32>
    %25 = arith.addf %23, %24 : vector<8x128xf32>
    %26 = math.absf %25 : vector<8x128xf32>
    %cst_16 = arith.constant dense<0.000000e+00> : vector<8xf32>
    %27 = vector.multi_reduction <add>, %26, %cst_16 [1] : vector<8x128xf32> to vector<8xf32>
    %28 = vector.shape_cast %27 : vector<8xf32> to vector<8x1xf32>
    %c0_17 = arith.constant 0 : index
    %c0_18 = arith.constant 0 : index
    %29 = vector.load %arg6[%c0_17, %c0_18] : memref<8x1xf32, #tpu.memory_space<vmem>>, vector<8x1xf32>
    tpu.vector_store %arg6[%c0_17, %c0_18], %28 {strides = array<i32>} : memref<8x1xf32, #tpu.memory_space<vmem>>, vector<8x1xf32>,
    return
  }
  func.func @transform_0(%arg0: i32) -> (i32, i32) {
    %c0_i32 = arith.constant 0 : i32
    %c0_i32_0 = arith.constant 0 : i32
    return %arg0, %c0_i32 : i32, i32
  }
  func.func @transform_1(%arg0: i32) -> (i32, i32) {
    %c0_i32 = arith.constant 0 : i32
    %c0_i32_0 = arith.constant 0 : i32
    return %arg0, %c0_i32 : i32, i32
  }
  func.func @transform_2(%arg0: i32) -> (i32, i32) {
    %c0_i32 = arith.constant 0 : i32
    %c0_i32_0 = arith.constant 0 : i32
    return %arg0, %c0_i32 : i32, i32
  }
  func.func @transform_3(%arg0: i32) -> (i32, i32) {
    %c0_i32 = arith.constant 0 : i32
    %c0_i32_0 = arith.constant 0 : i32
    %c0_i32_1 = arith.constant 0 : i32
    return %c0_i32, %c0_i32_0 : i32, i32
  }
  func.func @transform_4(%arg0: i32) -> (i32, i32) {
    %c0_i32 = arith.constant 0 : i32
    %c0_i32_0 = arith.constant 0 : i32
    %c0_i32_1 = arith.constant 0 : i32
    return %c0_i32, %c0_i32_0 : i32, i32
  }
  func.func @transform_5(%arg0: i32) -> (i32, i32) {
    %c0_i32 = arith.constant 0 : i32
    %c0_i32_0 = arith.constant 0 : i32
    return %arg0, %c0_i32 : i32, i32
  }
}

</mosaic_0001>

<llo_original>
// kernel: transe_forward.1
$region0: #{transe_forward.1}
  #allocation0 [shape = 'u32[]', space=smem, size = 0x4, offset = 0x4, fixed_abs, tag = 'smem constant byte address 0x4 - core index']
  #allocation1 [shape = 'u32[72,128]{1,0:T(1,128)}', space=vmem, size = 0x9000, scoped, tag = 'internal scratch']
  %s0 = inlined_call_operand.vmem [shape: s32[24,1], index: 0, kind: input, shape index: {}]
  %s1 = inlined_call_operand.vmem [shape: s32[24,1], index: 1, kind: input, shape index: {}]
  %s2 = inlined_call_operand.vmem [shape: s32[24,1], index: 2, kind: input, shape index: {}]
  %s3 = inlined_call_operand.vmem [shape: f32[16,128], index: 3, kind: input, shape index: {}]
  %s4 = inlined_call_operand.vmem [shape: f32[4,128], index: 4, kind: input, shape index: {}]
  %s5 = inlined_call_operand.vmem [shape: f32[24,1], index: 5, kind: output, shape index: {}]
  %s6 = sld [smem:[#allocation0]]
  $region53: #{transe_forward.1} parent=0
    _
  %s8 = ssub.s32 1, %s6
  %s9 = scalar_select 0, %s8, %s6
  loop: start=0, step=1, limit=5
  $region2: #{transe_forward.1} parent=0 // loop_pre_header
    _
  $region3: #{transe_forward.1} parent=0 // loop_header
    %s11 = sphi 0, %s15
    %p12 = scmp.ge.s32.totalorder %s11, 5
    %s21 = sphi 0, %s23
    %s24 = sphi 0, %s21
    %s25 = sphi 0, %s24
    %s41 = sphi 0, %s25
    %s47 = sphi 0, %s49
    %s50 = sphi 0, %s47
    %s51 = sphi 0, %s50
    %s67 = sphi 0, %s51
    %s73 = sphi 0, %s75
    %s76 = sphi 0, %s73
    %s77 = sphi 0, %s76
    %s93 = sphi 0, %s77
    %s97 = sphi 0, %s97
    %s99 = sphi 0, %s97
    %s100 = sphi 0, %s99
    %s114 = sphi 0, %s100
    %s118 = sphi 0, %s118
    %s120 = sphi 0, %s118
    %s121 = sphi 0, %s120
    %s135 = sphi 0, %s121
    %s141 = sphi 0, %s143
    %s144 = sphi 0, %s141
    %s145 = sphi 0, %s144
    %s161 = sphi 0, %s145
  $region4: #{transe_forward.1} parent=0 // loop_header_branch
    %14 = sbr.rel (%p12) target = $region8
  $region5: #{transe_forward.1} parent=0 // loop_body
    %s16 = ssub.s32 %s11, 1
    %s17 = ssub.s32 %s11, 2
    %s18 = sadd.s32 %s11, 1
    %s19 = ssub.s32 %s11, %s18
    %p20 = scmp.eq.s32.totalorder %s19, 0
    %s22 = sadd.s32 %s21, 1
    %s23 = scalar_select %p20, %s21, %s22
    %p26 = pneg %p20
    %p27 = scmp.eq.s32.totalorder %s11, 2
    %p28 = por %p26, %p27
    %p29 = scmp.ne.s32.totalorder %s21, %s24
    %p30 = scmp.eq.s32.totalorder %s11, 0
    %p31 = por %p29, %p30
    %p32 = scmp.ne.s32.totalorder %s21, %s24
    %p33 = scmp.eq.s32.totalorder %s16, 2
    %p34 = por %p32, %p33
    %p35 = scmp.ne.s32.totalorder %s24, %s25
    %p36 = scmp.eq.s32.totalorder %s16, 0
    %p37 = por %p35, %p36
    %p38 = scmp.ne.s32.totalorder %s24, %s25
    %p39 = scmp.eq.s32.totalorder %s17, 2
    %p40 = por %p38, %p39
    %p42 = scmp.ne.s32.totalorder %s25, %s41
    %p43 = scmp.eq.s32.totalorder %s17, 0
    %p44 = por %p42, %p43
    %s45 = ssub.s32 %s11, %s18
    %p46 = scmp.eq.s32.totalorder %s45, 0
    %s48 = sadd.s32 %s47, 1
    %s49 = scalar_select %p46, %s47, %s48
    %p52 = pneg %p46
    %p53 = scmp.eq.s32.totalorder %s11, 2
    %p54 = por %p52, %p53
    %p55 = scmp.ne.s32.totalorder %s47, %s50
    %p56 = scmp.eq.s32.totalorder %s11, 0
    %p57 = por %p55, %p56
    %p58 = scmp.ne.s32.totalorder %s47, %s50
    %p59 = scmp.eq.s32.totalorder %s16, 2
    %p60 = por %p58, %p59
    %p61 = scmp.ne.s32.totalorder %s50, %s51
    %p62 = scmp.eq.s32.totalorder %s16, 0
    %p63 = por %p61, %p62
    %p64 = scmp.ne.s32.totalorder %s50, %s51
    %p65 = scmp.eq.s32.totalorder %s17, 2
    %p66 = por %p64, %p65
    %p68 = scmp.ne.s32.totalorder %s51, %s67
    %p69 = scmp.eq.s32.totalorder %s17, 0
    %p70 = por %p68, %p69
    %s71 = ssub.s32 %s11, %s18
    %p72 = scmp.eq.s32.totalorder %s71, 0
    %s74 = sadd.s32 %s73, 1
    %s75 = scalar_select %p72, %s73, %s74
    %p78 = pneg %p72
    %p79 = scmp.eq.s32.totalorder %s11, 2
    %p80 = por %p78, %p79
    %p81 = scmp.ne.s32.totalorder %s73, %s76
    %p82 = scmp.eq.s32.totalorder %s11, 0
    %p83 = por %p81, %p82
    %p84 = scmp.ne.s32.totalorder %s73, %s76
    %p85 = scmp.eq.s32.totalorder %s16, 2
    %p86 = por %p84, %p85
    %p87 = scmp.ne.s32.totalorder %s76, %s77
    %p88 = scmp.eq.s32.totalorder %s16, 0
    %p89 = por %p87, %p88
    %p90 = scmp.ne.s32.totalorder %s76, %s77
    %p91 = scmp.eq.s32.totalorder %s17, 2
    %p92 = por %p90, %p91
    %p94 = scmp.ne.s32.totalorder %s77, %s93
    %p95 = scmp.eq.s32.totalorder %s17, 0
    %p96 = por %p94, %p95
    %s98 = sadd.s32 %s97, 1
    %p101 = scmp.eq.s32.totalorder %s11, 2
    %p102 = scmp.ne.s32.totalorder %s97, %s99
    %p103 = scmp.eq.s32.totalorder %s11, 0
    %p104 = por %p102, %p103
    %p105 = scmp.ne.s32.totalorder %s97, %s99
    %p106 = scmp.eq.s32.totalorder %s16, 2
    %p107 = por %p105, %p106
    %p108 = scmp.ne.s32.totalorder %s99, %s100
    %p109 = scmp.eq.s32.totalorder %s16, 0
    %p110 = por %p108, %p109
    %p111 = scmp.ne.s32.totalorder %s99, %s100
    %p112 = scmp.eq.s32.totalorder %s17, 2
    %p113 = por %p111, %p112
    %p115 = scmp.ne.s32.totalorder %s100, %s114
    %p116 = scmp.eq.s32.totalorder %s17, 0
    %p117 = por %p115, %p116
    %s119 = sadd.s32 %s118, 1
    %p122 = scmp.eq.s32.totalorder %s11, 2
    %p123 = scmp.ne.s32.totalorder %s118, %s120
    %p124 = scmp.eq.s32.totalorder %s11, 0
    %p125 = por %p123, %p124
    %p126 = scmp.ne.s32.totalorder %s118, %s120
    %p127 = scmp.eq.s32.totalorder %s16, 2
    %p128 = por %p126, %p127
    %p129 = scmp.ne.s32.totalorder %s120, %s121
    %p130 = scmp.eq.s32.totalorder %s16, 0
    %p131 = por %p129, %p130
    %p132 = scmp.ne.s32.totalorder %s120, %s121
    %p133 = scmp.eq.s32.totalorder %s17, 2
    %p134 = por %p132, %p133
    %p136 = scmp.ne.s32.totalorder %s121, %s135
    %p137 = scmp.eq.s32.totalorder %s17, 0
    %p138 = por %p136, %p137
    %s139 = ssub.s32 %s11, %s18
    %p140 = scmp.eq.s32.totalorder %s139, 0
    %s142 = sadd.s32 %s141, 1
    %s143 = scalar_select %p140, %s141, %s142
    %p146 = pneg %p140
    %p147 = scmp.eq.s32.totalorder %s11, 2
    %p148 = por %p146, %p147
    %p149 = scmp.ne.s32.totalorder %s141, %s144
    %p150 = scmp.eq.s32.totalorder %s11, 0
    %p151 = por %p149, %p150
    %p152 = scmp.ne.s32.totalorder %s141, %s144
    %p153 = scmp.eq.s32.totalorder %s16, 2
    %p154 = por %p152, %p153
    %p155 = scmp.ne.s32.totalorder %s144, %s145
    %p156 = scmp.eq.s32.totalorder %s16, 0
    %p157 = por %p155, %p156
    %p158 = scmp.ne.s32.totalorder %s144, %s145
    %p159 = scmp.eq.s32.totalorder %s17, 2
    %p160 = por %p158, %p159
    %p162 = scmp.ne.s32.totalorder %s145, %s161
    %p163 = scmp.eq.s32.totalorder %s17, 0
    %p164 = por %p162, %p163
    %p165 = scmp.le.s32.totalorder 1, %s11
    %p166 = scmp.lt.s32.totalorder %s11, 4
    %p167 = pnand %p165, %p166
    %p168 = pneg %p167
    // Predicated region
    $region9: #{transe_forward.1} parent=5 // pred_check
      _
    $region10: #{transe_forward.1} parent=5 // pred_check_branch
      %170 = sbr.rel (%p167) target = $region12
    $region11: #{transe_forward.1} parent=5 // pred_region
      %s171 = ssub.s32 %s11, 1
      // Predicated region
      $region13: #{transe_forward.1} parent=11 // pred_check
        %p172 = pneg %p110
      $region14: #{transe_forward.1} parent=11 // pred_check_branch
        %174 = sbr.rel (%p172) target = $region16
      $region15: #{transe_forward.1} parent=11 // pred_region
        _
      $region16: #{transe_forward.1} parent=11 // pred_fallthru
        _
      // Predicated region
      $region17: #{transe_forward.1} parent=11 // pred_check
        %p175 = pneg %p131
      $region18: #{transe_forward.1} parent=11 // pred_check_branch
        %177 = sbr.rel (%p175) target = $region20
      $region19: #{transe_forward.1} parent=11 // pred_region
        _
      $region20: #{transe_forward.1} parent=11 // pred_fallthru
        _
    $region12: #{transe_forward.1} parent=5 // pred_fallthru
      _
    %p178 = scmp.lt.s32.totalorder %s11, 3
    // Predicated region
    $region21: #{transe_forward.1} parent=5 // pred_check
      %p179 = pneg %p178
    $region22: #{transe_forward.1} parent=5 // pred_check_branch
      %181 = sbr.rel (%p179) target = $region24
    $region23: #{transe_forward.1} parent=5 // pred_region
      // Predicated region
      $region25: #{transe_forward.1} parent=23 // pred_check
        %p182 = pneg %p31
      $region26: #{transe_forward.1} parent=23 // pred_check_branch
        %184 = sbr.rel (%p182) target = $region28
      $region27: #{transe_forward.1} parent=23 // pred_region
        %p185 = scmp.lt.s32.totalorder %s11, 2
        %s186 = scalar_select %p185, %s11, 2
        %s187 = smul.addr %s186, 8
        %s188 = scalar_lea.vmem %s0, %s187
      $region28: #{transe_forward.1} parent=23 // pred_fallthru
        _
      // Predicated region
      $region29: #{transe_forward.1} parent=23 // pred_check
        %p189 = pneg %p57
      $region30: #{transe_forward.1} parent=23 // pred_check_branch
        %191 = sbr.rel (%p189) target = $region32
      $region31: #{transe_forward.1} parent=23 // pred_region
        %p192 = scmp.lt.s32.totalorder %s11, 2
        %s193 = scalar_select %p192, %s11, 2
        %s194 = smul.addr %s193, 8
        %s195 = scalar_lea.vmem %s1, %s194
      $region32: #{transe_forward.1} parent=23 // pred_fallthru
        _
      // Predicated region
      $region33: #{transe_forward.1} parent=23 // pred_check
        %p196 = pneg %p83
      $region34: #{transe_forward.1} parent=23 // pred_check_branch
        %198 = sbr.rel (%p196) target = $region36
      $region35: #{transe_forward.1} parent=23 // pred_region
        %p199 = scmp.lt.s32.totalorder %s11, 2
        %s200 = scalar_select %p199, %s11, 2
        %s201 = smul.addr %s200, 8
        %s202 = scalar_lea.vmem %s2, %s201
      $region36: #{transe_forward.1} parent=23 // pred_fallthru
        _
    $region24: #{transe_forward.1} parent=5 // pred_fallthru
      _
    %p203 = scmp.le.s32.totalorder 1, %s11
    %p204 = scmp.lt.s32.totalorder %s11, 4
    %p205 = pnand %p203, %p204
    %p206 = pneg %p205
    // Predicated region
    $region37: #{transe_forward.1} parent=5 // pred_check
      _
    $region38: #{transe_forward.1} parent=5 // pred_check_branch
      %208 = sbr.rel (%p205) target = $region40
    $region39: #{transe_forward.1} parent=5 // pred_region
      %s209 = ssub.s32 %s11, 1
      %p210 = scmp.lt.s32.totalorder %s16, 2
      %s211 = scalar_select %p210, %s16, 2
      %s212 = smul.addr %s211, 8
      %s213 = scalar_lea.vmem %s0, %s212
      %p214 = pneg %p37
      %p215 = pneg %p34
      %p216 = scmp.lt.s32.totalorder %s16, 2
      %s217 = scalar_select %p216, %s16, 2
      %s218 = smul.addr %s217, 8
      %s219 = scalar_lea.vmem %s1, %s218
      %p220 = pneg %p63
      %p221 = pneg %p60
      %p222 = scmp.lt.s32.totalorder %s16, 2
      %s223 = scalar_select %p222, %s16, 2
      %s224 = smul.addr %s223, 8
      %s225 = scalar_lea.vmem %s2, %s224
      %p226 = pneg %p89
      %p227 = pneg %p86
      %p228 = pneg %p110
      %p229 = pneg %p107
      %p230 = pneg %p131
      %p231 = pneg %p128
      %p232 = pneg %p157
      %p233 = pneg %p154
      %p234 = scmp.lt.s32.totalorder %s16, 2
      %s235 = scalar_select %p234, %s16, 2
      %s236 = smul.addr %s235, 8
      %s237 = scalar_lea.vmem %s5, %s236
      %p238 = scmp.lt.s32.totalorder %s16, 2
      %s239 = scalar_select %p238, %s16, 2
      %s240 = smul.addr %s239, 8
      %s241 = scalar_lea.vmem %s0, %s240
      %p242 = scmp.lt.s32.totalorder %s16, 2
      %s243 = scalar_select %p242, %s16, 2
      %s244 = smul.addr %s243, 8
      %s245 = scalar_lea.vmem %s1, %s244
      %p246 = scmp.lt.s32.totalorder %s16, 2
      %s247 = scalar_select %p246, %s16, 2
      %s248 = smul.addr %s247, 8
      %s249 = scalar_lea.vmem %s2, %s248
      %p250 = scmp.lt.s32.totalorder %s16, 2
      %s251 = scalar_select %p250, %s16, 2
      %s252 = smul.addr %s251, 8
      %s253 = scalar_lea.vmem %s5, %s252
      %v254 = vld [vmem:[%s3] sm:$0xff]
      %v255 = vld [vmem:[%s3 + $0x8] sm:$0xff]
      %v256 = vld [vmem:[%s4] sm:$0xf]
      %v257 = vlaneseq
      %v258 = vand.u32 %v257, 127
      %v259 = vld [vmem:[%s241] sm:$0xff]
      %260 = vset.pattern.permute.xlu0 0
      %261 = vperm.xlu0 %260, %v259
      %v262 = vpop.permute.xlu0 %261
      %vm263 = vcmp.eq.s32.totalorder %v262, %v258
      %v264 = vsel %vm263, 1.0, 0.0
      %v265 = vld [vmem:[%s249] sm:$0xff]
      %266 = vset.pattern.permute.xlu0 0
      %267 = vperm.xlu0 %266, %v265
      %v268 = vpop.permute.xlu0 %267
      %vm269 = vcmp.eq.s32.totalorder %v268, %v258
      %v270 = vsel %vm269, 1.0, 0.0
      %v271 = vsub.f32 %v264, %v270
      %v272 = vld [vmem:[%s245] sm:$0xff]
      %273 = vset.pattern.permute.xlu0 0
      %274 = vperm.xlu0 %273, %v272
      %v275 = vpop.permute.xlu0 %274
      %vm276 = vcmp.eq.s32.totalorder %v275, %v258
      %v277 = vsel %vm276, 1.0, 0.0
      %vm278 = vcmask 31744
      %v280 = vsel %vm278, %v277, 0
      %vm282 = vcmask 1043456
      %v284 = vsel %vm282, %v256, 0
      %286 = vmatpush.msra.mxu0 0.0
      %287 = vmatpush.msra.mxu0 0.0
      %288 = vmatpush.msra.mxu0 0.0
      %289 = vmatpush.msra.mxu0 0.0
      %290 = vmatpush.msra.mxu0 0.0
      %291 = vmatpush.msra.mxu0 0.0
      %292 = vmatpush.msra.mxu0 0.0
      %293 = vmatpush.msra.mxu0 0.0
      %294 = vmatpush.msra.mxu0 0.0
      %295 = vmatpush.msra.mxu0 0.0
      %296 = vmatpush.msra.mxu0 0.0
      %297 = vmatpush.msra.mxu0 0.0
      %298 = vmatpush.msra.mxu0 0.0
      %299 = vmatpush.msra.mxu0 0.0
      %300 = vmatpush.msra.mxu0 0.0
      %301 = vmatpush.msra.mxu0 %v284
      %302 = vmatmul.f32.gmra.mxu0 %v280
      %v303 = vpop.f32.mrf.mxu0
      %v304 = vadd.f32 0.0, %v303
      %305 = vdwg.mxu0
      %vm306 = vcmask 130048
      %v308 = vsel %vm306, %v271, 0
      %310 = vmatpush.msra.mxu0 0.0
      %311 = vmatpush.msra.mxu0 0.0
      %312 = vmatpush.msra.mxu0 0.0
      %313 = vmatpush.msra.mxu0 0.0
      %314 = vmatpush.msra.mxu0 0.0
      %315 = vmatpush.msra.mxu0 0.0
      %316 = vmatpush.msra.mxu0 0.0
      %317 = vmatpush.msra.mxu0 0.0
      %318 = vmatpush.msra.mxu0 0.0
      %319 = vmatpush.msra.mxu0 0.0
      %320 = vmatpush.msra.mxu0 0.0
      %321 = vmatpush.msra.mxu0 0.0
      %322 = vmatpush.msra.mxu0 0.0
      %323 = vmatpush.msra.mxu0 0.0
      %324 = vmatpush.msra.mxu0 %v255
      %325 = vmatpush.msra.mxu0 %v254
      %326 = vmatmul.f32.gmra.mxu0 %v308
      %v327 = vpop.f32.mrf.mxu0
      %v328 = vadd.f32 %v304, %v327
      %329 = vdwg.mxu0
      %v330 = vand.u32 2147483647, %v328
      %331 = vadd.xlane.f32.xlu0 %v330
      %v332 = vpop.xlane.xlu0 %331
      %vm333 = vcmask 7168
      %334 = vst.msk [vmem:[%s253] sm:$0xff] %vm333, %v332
      %p335 = scmp.lt.s32.totalorder %s16, 2
      %s336 = scalar_select %p335, %s16, 2
      %s337 = smul.addr %s336, 8
      %s338 = scalar_lea.vmem %s5, %s337
      // Predicated region
      $region41: #{transe_forward.1} parent=39 // pred_check
        %p339 = pneg %p154
      $region42: #{transe_forward.1} parent=39 // pred_check_branch
        %341 = sbr.rel (%p339) target = $region44
      $region43: #{transe_forward.1} parent=39 // pred_region
        _
      $region44: #{transe_forward.1} parent=39 // pred_fallthru
        _
    $region40: #{transe_forward.1} parent=5 // pred_fallthru
      _
    %p342 = scmp.le.s32.totalorder 2, %s11
    // Predicated region
    $region45: #{transe_forward.1} parent=5 // pred_check
      %p343 = pneg %p342
    $region46: #{transe_forward.1} parent=5 // pred_check_branch
      %345 = sbr.rel (%p343) target = $region48
    $region47: #{transe_forward.1} parent=5 // pred_region
      %s346 = ssub.s32 %s11, 2
      // Predicated region
      $region49: #{transe_forward.1} parent=47 // pred_check
        %p347 = pneg %p160
      $region50: #{transe_forward.1} parent=47 // pred_check_branch
        %349 = sbr.rel (%p347) target = $region52
      $region51: #{transe_forward.1} parent=47 // pred_region
        %p350 = scmp.lt.s32.totalorder %s17, 2
        %s351 = scalar_select %p350, %s17, 2
        %s352 = smul.addr %s351, 8
        %s353 = scalar_lea.vmem %s5, %s352
      $region52: #{transe_forward.1} parent=47 // pred_fallthru
        _
    $region48: #{transe_forward.1} parent=5 // pred_fallthru
      _
  $region6: #{transe_forward.1} parent=0 // loop_footer
    %s15 = sadd.s32 1, %s11
  $region7: #{transe_forward.1} parent=0 // loop_footer_branch
    %10 = sbr.rel target = $region3
  $region8: #{transe_forward.1} parent=0 // loop_exit
    _

</llo_original>
